<compile_context>
chip_gen: v7x
topology: tpu7x:2x2x1
jax: 0.10.0
libtpu: 0.0.40
codegen_flags: <defaults>
</compile_context>

<pallas_src>
import functools

import jax
import jax.numpy as jnp
from jax import lax
from jax.experimental import pallas as pl
from jax.experimental.pallas import tpu as pltpu


def _round_up(v, m):
    return (v + m - 1) // m * m


def _fp8_linear_kernel(*refs, has_bias):
    """Tiled matmul with f32 accumulator; bias added on the last K step.

    refs = (x_ref, w_ref, [b_ref], o_ref, acc_ref)
      x_ref: (tm, tk) activations in their native dtype
      w_ref: (tn, tk) weight tile, float8_e5m2, PyTorch (N, K) layout
    """
    if has_bias:
        x_ref, w_ref, b_ref, o_ref, acc_ref = refs
    else:
        x_ref, w_ref, o_ref, acc_ref = refs
        b_ref = None

    k = pl.program_id(2)

    @pl.when(k == 0)
    def _():
        acc_ref[...] = jnp.zeros_like(acc_ref)

    # Activation quantization round-trip (x.to(float8_e5m2)) done in-kernel on
    # the VPU; upcast to bf16 which represents fp8_e5m2 exactly.  The weight is
    # already fp8 in VMEM and is upcast in-kernel as well.
    xq = x_ref[...].astype(jnp.float8_e5m2).astype(jnp.bfloat16)
    wq = w_ref[...].astype(jnp.bfloat16)

    # y[tm, tn] += xq[tm, tk] @ wq[tn, tk]^T : contract the last (K) axis of
    # both tiles so the weight never needs a host-side transpose.
    acc_ref[...] += lax.dot_general(
        xq,
        wq,
        dimension_numbers=(((1,), (1,)), ((), ())),
        preferred_element_type=jnp.float32,
    )

    @pl.when(k == pl.num_programs(2) - 1)
    def _():
        acc = acc_ref[...]
        if has_bias:
            acc = acc + b_ref[...]
        o_ref[...] = acc.astype(o_ref.dtype)


def fp8_e5m2_linear(x, weight_fp8, bias=None, *, tm=None, tn=None, tk=None):
    """y = fp8e5m2(x) @ weight_fp8^T (+ bias), output in x.dtype.

    x:          (M, K) activations (f32 or bf16).
    weight_fp8: (out_features, in_features) = (N, K), dtype float8_e5m2.
    bias:       (N,) float32 or None.
    """
    out_dtype = x.dtype
    M, K = x.shape
    N, K_w = weight_fp8.shape
    assert K == K_w, (K, K_w)

    # MXU/lane-friendly tiles: 256-aligned on N/K (2x256x256 MXU on v6e/v7x,
    # also 128-aligned for v5e), tm a multiple of 16, lane-dense output
    # (tn >= 256).  With double buffering these stay a few MiB -- safe under
    # v7x's 64 MiB VMEM.  Ragged shapes are padded, never rejected.
    tm = tm or min(256, _round_up(M, 16))
    tn = tn or min(512, _round_up(N, 256))
    tk = tk or min(512, _round_up(K, 256))

    Mp, Np, Kp = _round_up(M, tm), _round_up(N, tn), _round_up(K, tk)

    xp = x if (Mp, Kp) == (M, K) else jnp.pad(x, ((0, Mp - M), (0, Kp - K)))
    wp = (
        weight_fp8
        if (Np, Kp) == (N, K)
        else jnp.pad(weight_fp8, ((0, Np - N), (0, Kp - K)))
    )

    has_bias = bias is not None
    operands = [xp, wp]
    in_specs = [
        pl.BlockSpec((tm, tk), lambda i, j, k: (i, k)),  # activations (M, K)
        pl.BlockSpec((tn, tk), lambda i, j, k: (j, k)),  # fp8 weight (N, K)
    ]
    if has_bias:
        bp = bias.astype(jnp.float32)
        if Np != N:
            bp = jnp.pad(bp, (0, Np - N))
        operands.append(bp.reshape(1, Np))
        in_specs.append(pl.BlockSpec((1, tn), lambda i, j, k: (0, j)))

    grid = (Mp // tm, Np // tn, Kp // tk)

    cost = pl.CostEstimate(
        flops=2 * Mp * Np * Kp,
        transcendentals=0,
        bytes_accessed=(
            Mp * Kp * x.dtype.itemsize            # activations, native width
            + Np * Kp * 1                         # weight streamed as fp8
            + Mp * Np * jnp.dtype(out_dtype).itemsize
            + (Np * 4 if has_bias else 0)
        ),
    )

    out = pl.pallas_call(
        functools.partial(_fp8_linear_kernel, has_bias=has_bias),
        out_shape=jax.ShapeDtypeStruct((Mp, Np), out_dtype),
        grid_spec=pltpu.PrefetchScalarGridSpec(
            num_scalar_prefetch=0,
            grid=grid,
            in_specs=in_specs,
            out_specs=pl.BlockSpec((tm, tn), lambda i, j, k: (i, j)),
            scratch_shapes=[pltpu.VMEM((tm, tn), jnp.float32)],
        ),
        compiler_params=pltpu.CompilerParams(
            dimension_semantics=("parallel", "parallel", "arbitrary"),
        ),
        cost_estimate=cost,
    )(*operands)

    if (Mp, Np) != (M, N):
        out = out[:M, :N]
    return out


if __name__ == "__main__":
    # Small, deterministic example consistent with a linear layer:
    # batch=2, seq=4 -> M=8 tokens; in_features=32; out_features=64.
    key = jax.random.PRNGKey(0)
    kx, kw, kb = jax.random.split(key, 3)

    M, in_features, out_features = 8, 32, 64

    x = jax.random.normal(kx, (M, in_features), dtype=jnp.float32)
    weight_fp8 = (
        jax.random.normal(kw, (out_features, in_features), dtype=jnp.float32) * 0.1
    ).astype(jnp.float8_e5m2)
    bias = jax.random.normal(kb, (out_features,), dtype=jnp.float32) * 0.01

    # Reference computation in plain JAX with identical quantization semantics.
    xq_ref = x.astype(jnp.float8_e5m2).astype(jnp.float32)
    wq_ref = weight_fp8.astype(jnp.float32)
    y_ref_bias = xq_ref @ wq_ref.T + bias[None, :]
    y_ref_nobias = xq_ref @ wq_ref.T

    # With-bias path (use_bias=True).
    y = jax.block_until_ready(fp8_e5m2_linear(x, weight_fp8, bias))
    assert y.shape == (M, out_features)
    assert y.dtype == x.dtype
    assert jnp.allclose(y, y_ref_bias.astype(x.dtype), atol=1e-4, rtol=1e-4)

    # No-bias path (use_bias=False) -> separate compiled variant.
    y2 = jax.block_until_ready(fp8_e5m2_linear(x, weight_fp8, None))
    assert y2.shape == (M, out_features)
    assert y2.dtype == x.dtype
    assert jnp.allclose(y2, y_ref_nobias.astype(x.dtype), atol=1e-4, rtol=1e-4)

    print("KERNEL_OK")
</pallas_src>

<mosaic_0001>
module attributes {stable_mosaic.version = 11 : i64} {
  func.func @_fp8_linear_kernel(%arg0: i32, %arg1: i32, %arg2: i32, %arg3: memref<16x256xf32, #tpu.memory_space<vmem>>, %arg4: memref<256x256xf8E5M2, #tpu.memory_space<vmem>>, %arg5: memref<1x256xf32, #tpu.memory_space<vmem>>, %arg6: memref<16x256xf32, #tpu.memory_space<vmem>>, %arg7: memref<16x256xf32, #tpu.memory_space<vmem>>) attributes {dimension_semantics = [#tpu.dimension_semantics<parallel>, #tpu.dimension_semantics<parallel>, #tpu.dimension_semantics<arbitrary>], iteration_bounds = array<i64: 1, 1, 1>, scalar_prefetch = 0 : i64, scratch_operands = 1 : i64, tpu.core_type = #tpu.core_type<tc>, window_params = [{transform_indices = @transform_0, window_bounds = array<i64: 16, 256>}, {transform_indices = @transform_1, window_bounds = array<i64: 256, 256>}, {transform_indices = @transform_2, window_bounds = array<i64: 1, 256>}, {transform_indices = @transform_3, window_bounds = array<i64: 16, 256>}]} {
    %c0_i32 = arith.constant 0 : i32
    %0 = arith.cmpi eq, %arg2, %c0_i32 : i32
    %1 = arith.extui %0 : i1 to i32
    %c0_i32_0 = arith.constant 0 : i32
    %2 = arith.cmpi ne, %1, %c0_i32_0 : i32
    scf.if %2 {
      %cst_10 = arith.constant 0.000000e+00 : f32
      %15 = vector.broadcast %cst_10 : f32 to vector<16x256xf32>
      %c0_11 = arith.constant 0 : index
      %c0_12 = arith.constant 0 : index
      %16 = vector.load %arg7[%c0_11, %c0_12] : memref<16x256xf32, #tpu.memory_space<vmem>>, vector<16x256xf32>
      tpu.vector_store %arg7[%c0_11, %c0_12], %15 {strides = array<i32>} : memref<16x256xf32, #tpu.memory_space<vmem>>, vector<16x256xf32>,
    } else {
    }
    %c0 = arith.constant 0 : index
    %c0_1 = arith.constant 0 : index
    %3 = vector.load %arg3[%c0, %c0_1] : memref<16x256xf32, #tpu.memory_space<vmem>>, vector<16x256xf32>
    %4 = arith.truncf %3 : vector<16x256xf32> to vector<16x256xf8E5M2>
    %5 = arith.extf %4 : vector<16x256xf8E5M2> to vector<16x256xbf16>
    %c0_2 = arith.constant 0 : index
    %c0_3 = arith.constant 0 : index
    %6 = vector.load %arg4[%c0_2, %c0_3] : memref<256x256xf8E5M2, #tpu.memory_space<vmem>>, vector<256x256xf8E5M2>
    %7 = arith.extf %6 : vector<256x256xf8E5M2> to vector<256x256xbf16>
    %c0_4 = arith.constant 0 : index
    %c0_5 = arith.constant 0 : index
    %8 = vector.load %arg7[%c0_4, %c0_5] : memref<16x256xf32, #tpu.memory_space<vmem>>, vector<16x256xf32>
    %cst = arith.constant dense<0.000000e+00> : vector<16x256xf32>
    %9 = tpu.matmul %5, %7, %cst {dimension_numbers = #tpu.dot_dimension_numbers<[1], [1], [0], [0], [0, 0, 1, 0], [], []>} : vector<16x256xbf16>, vector<256x256xbf16>, vector<16x256xf32> -> vector<16x256xf32>
    %10 = arith.addf %8, %9 : vector<16x256xf32>
    %c0_6 = arith.constant 0 : index
    %c0_7 = arith.constant 0 : index
    %11 = vector.load %arg7[%c0_6, %c0_7] : memref<16x256xf32, #tpu.memory_space<vmem>>, vector<16x256xf32>
    tpu.vector_store %arg7[%c0_6, %c0_7], %10 {strides = array<i32>} : memref<16x256xf32, #tpu.memory_space<vmem>>, vector<16x256xf32>,
    %c0_i32_8 = arith.constant 0 : i32
    %12 = arith.cmpi eq, %arg2, %c0_i32_8 : i32
    %13 = arith.extui %12 : i1 to i32
    %c0_i32_9 = arith.constant 0 : i32
    %14 = arith.cmpi ne, %13, %c0_i32_9 : i32
    scf.if %14 {
      %c0_10 = arith.constant 0 : index
      %c0_11 = arith.constant 0 : index
      %15 = vector.load %arg7[%c0_10, %c0_11] : memref<16x256xf32, #tpu.memory_space<vmem>>, vector<16x256xf32>
      %c0_12 = arith.constant 0 : index
      %c0_13 = arith.constant 0 : index
      %16 = vector.load %arg5[%c0_12, %c0_13] : memref<1x256xf32, #tpu.memory_space<vmem>>, vector<1x256xf32>
      %17 = vector.broadcast %16 : vector<1x256xf32> to vector<16x256xf32>
      %18 = arith.addf %15, %17 : vector<16x256xf32>
      %c0_14 = arith.constant 0 : index
      %c0_15 = arith.constant 0 : index
      %19 = vector.load %arg6[%c0_14, %c0_15] : memref<16x256xf32, #tpu.memory_space<vmem>>, vector<16x256xf32>
      tpu.vector_store %arg6[%c0_14, %c0_15], %18 {strides = array<i32>} : memref<16x256xf32, #tpu.memory_space<vmem>>, vector<16x256xf32>,
    } else {
    }
    return
  }
  func.func @transform_0(%arg0: i32, %arg1: i32, %arg2: i32) -> (i32, i32) {
    %c0_i32 = arith.constant 0 : i32
    return %arg0, %arg2 : i32, i32
  }
  func.func @transform_1(%arg0: i32, %arg1: i32, %arg2: i32) -> (i32, i32) {
    %c0_i32 = arith.constant 0 : i32
    return %arg1, %arg2 : i32, i32
  }
  func.func @transform_2(%arg0: i32, %arg1: i32, %arg2: i32) -> (i32, i32) {
    %c0_i32 = arith.constant 0 : i32
    %c0_i32_0 = arith.constant 0 : i32
    return %c0_i32, %arg1 : i32, i32
  }
  func.func @transform_3(%arg0: i32, %arg1: i32, %arg2: i32) -> (i32, i32) {
    %c0_i32 = arith.constant 0 : i32
    return %arg0, %arg1 : i32, i32
  }
}

</mosaic_0001>

<llo_original>
// kernel: tpu_custom_call.1
$region0: #{tpu_custom_call.1}
  #allocation0 [shape = 'u32[]', space=smem, size = 0x4, offset = 0x4, fixed_abs, tag = 'smem constant byte address 0x4 - core index']
  #allocation1 [shape = 'u32[144,128]{1,0:T(1,128)}', space=vmem, size = 0x12000, scoped, tag = 'internal scratch']
  #allocation2 [shape = 'f32[16,256]{1,0:T(8,128)}', space=vmem, size = 0x4000, scoped, tag = 'scratch operand']
  %s0 = inlined_call_operand.hbm [shape: f32[16,256], index: 0, kind: input, shape index: {}]
  %s1 = inlined_call_operand.hbm [shape: f8e5m2[256,256], index: 1, kind: input, shape index: {}]
  %s2 = inlined_call_operand.vmem [shape: f32[1,256], index: 2, kind: input, shape index: {}]
  %s3 = inlined_call_operand.hbm [shape: f32[16,256], index: 3, kind: output, shape index: {}]
  %s4 = sld [smem:[#allocation0]]
  $region38: #{tpu_custom_call.1} parent=0
    _
  %s6 = ssub.s32 1, %s4
  %s7 = scalar_select 0, %s6, %s4
  $region1: #{tpu_custom_call.1} parent=0
    #allocation3 [shape = 'u8[16384]{0}', space=vmem, size = 0x4000, scoped, tag = 'input window, operand 0, single buffered']
    #allocation4 [shape = 's32[1]{0}', space=sflag, size = 0x4, scoped, tag = 'scoped memory for tpu_custom_call.1']
    #allocation5 [shape = 's32[1]{0}', space=sflag, size = 0x4, scoped, tag = 'scoped memory for tpu_custom_call.1']
    #allocation6 [shape = 'u8[65536]{0}', space=vmem, size = 0x10000, scoped, tag = 'input window, operand 1, single buffered']
    #allocation7 [shape = 's32[1]{0}', space=sflag, size = 0x4, scoped, tag = 'scoped memory for tpu_custom_call.1']
    #allocation8 [shape = 'u8[16384]{0}', space=vmem, size = 0x4000, scoped, tag = 'output window, operand 0, single buffered']
    %8 = vsyncpa [#allocation4], 0
    %9 = vsyncpa [#allocation7], 0
    %10 = vsyncpa [#allocation5], 0
    // Predicated region
    $region2: #{tpu_custom_call.1} parent=1 // pred_check
      _
    $region3: #{tpu_custom_call.1} parent=1 // pred_check_branch
      %12 = sbr.rel (0) target = $region5
    $region4: #{tpu_custom_call.1} parent=1 // pred_region
      %s14 = ssub.s32 512, 512
      %15 = vsyncadd [#allocation4], %s14
      %s16 = sshll.u32 [#allocation3], 4
      %s17 = int_to_ptr.vmem [resolvable:$true] %s16
      %22 = dma.hbm_to_vmem [thread:$0]  %s0, 512, %s17, [#allocation4], 256, 256, 16
    $region5: #{tpu_custom_call.1} parent=1 // pred_fallthru
      _
    // Predicated region
    $region6: #{tpu_custom_call.1} parent=1 // pred_check
      _
    $region7: #{tpu_custom_call.1} parent=1 // pred_check_branch
      %24 = sbr.rel (0) target = $region9
    $region8: #{tpu_custom_call.1} parent=1 // pred_region
      %s26 = ssub.s32 2048, 2048
      %27 = vsyncadd [#allocation7], %s26
      %s28 = sshll.u32 [#allocation6], 4
      %s29 = int_to_ptr.vmem [resolvable:$true] %s28
      %34 = dma.hbm_to_vmem [thread:$0]  %s1, 2048, %s29, [#allocation7], 256, 256, 16
    $region9: #{tpu_custom_call.1} parent=1 // pred_fallthru
      _
    // Predicated region
    $region10: #{tpu_custom_call.1} parent=1 // pred_check
      _
    $region11: #{tpu_custom_call.1} parent=1 // pred_check_branch
      %36 = sbr.rel (0) target = $region13
    $region12: #{tpu_custom_call.1} parent=1 // pred_region
      _
    $region13: #{tpu_custom_call.1} parent=1 // pred_fallthru
      _
    // Predicated region
    $region14: #{tpu_custom_call.1} parent=1 // pred_check
      _
    $region15: #{tpu_custom_call.1} parent=1 // pred_check_branch
      %38 = sbr.rel (0) target = $region17
    $region16: #{tpu_custom_call.1} parent=1 // pred_region
      %39 = dma.done [#allocation4], 512
    $region17: #{tpu_custom_call.1} parent=1 // pred_fallthru
      _
    // Predicated region
    $region18: #{tpu_custom_call.1} parent=1 // pred_check
      _
    $region19: #{tpu_custom_call.1} parent=1 // pred_check_branch
      %41 = sbr.rel (0) target = $region21
    $region20: #{tpu_custom_call.1} parent=1 // pred_region
      %42 = dma.done [#allocation7], 2048
    $region21: #{tpu_custom_call.1} parent=1 // pred_fallthru
      _
    %p43 = scmp.eq.s32.totalorder 0, 0
    // Predicated region
    $region22: #{tpu_custom_call.1} parent=1 // pred_check
      %p44 = pneg %p43
    $region23: #{tpu_custom_call.1} parent=1 // pred_check_branch
      %46 = sbr.rel (%p44) target = $region25
    $region24: #{tpu_custom_call.1} parent=1 // pred_region
      %47 = vst [vmem:[#allocation2] sm:$0xff] 0.0
      %48 = vst [vmem:[#allocation2 + $0x8] sm:$0xff] 0.0
      %49 = vst [vmem:[#allocation2 + $0x10] sm:$0xff] 0.0
      %50 = vst [vmem:[#allocation2 + $0x18] sm:$0xff] 0.0
    $region25: #{tpu_custom_call.1} parent=1 // pred_fallthru
      _
    %v51 = vld [vmem:[#allocation3] sm:$0xff]
    %v52 = vld [vmem:[#allocation3 + $0x8] sm:$0xff]
    %v53 = vld [vmem:[#allocation3 + $0x10] sm:$0xff]
    %v54 = vld [vmem:[#allocation3 + $0x18] sm:$0xff]
    %v55 = vpack.c.f32.eXmY %v51, %v53, 57749
    %v59 = vpack.c.b8 %v55, %v55
    %v61 = vpack.c.f32.eXmY %v52, %v54, 57749
    %v65 = vpack.c.b8 %v61, %v61
    %v67 = vunpack.c.l.bf8 %v59
    %v68 = vunpack.c.l.bf8 %v65
    %v69 = vld [vmem:[#allocation6] sm:$0xff]
    %v70 = vld [vmem:[#allocation6 + $0x8] sm:$0xff]
    %v71 = vld [vmem:[#allocation6 + $0x10] sm:$0xff]
    %v72 = vld [vmem:[#allocation6 + $0x18] sm:$0xff]
    %v73 = vld [vmem:[#allocation6 + $0x20] sm:$0xff]
    %v74 = vld [vmem:[#allocation6 + $0x28] sm:$0xff]
    %v75 = vld [vmem:[#allocation6 + $0x30] sm:$0xff]
    %v76 = vld [vmem:[#allocation6 + $0x38] sm:$0xff]
    %v77 = vld [vmem:[#allocation6 + $0x40] sm:$0xff]
    %v78 = vld [vmem:[#allocation6 + $0x48] sm:$0xff]
    %v79 = vld [vmem:[#allocation6 + $0x50] sm:$0xff]
    %v80 = vld [vmem:[#allocation6 + $0x58] sm:$0xff]
    %v81 = vld [vmem:[#allocation6 + $0x60] sm:$0xff]
    %v82 = vld [vmem:[#allocation6 + $0x68] sm:$0xff]
    %v83 = vld [vmem:[#allocation6 + $0x70] sm:$0xff]
    %v84 = vld [vmem:[#allocation6 + $0x78] sm:$0xff]
    %v85 = vunpack.c.l.bf8 %v69
    %v86 = vunpack.c.l.bf8 %v70
    %v87 = vunpack.c.h.bf8 %v69
    %v88 = vunpack.c.h.bf8 %v70
    %v89 = vunpack.c.l.bf8 %v71
    %v90 = vunpack.c.l.bf8 %v72
    %v91 = vunpack.c.h.bf8 %v71
    %v92 = vunpack.c.h.bf8 %v72
    %v93 = vunpack.c.l.bf8 %v73
    %v94 = vunpack.c.l.bf8 %v74
    %v95 = vunpack.c.h.bf8 %v73
    %v96 = vunpack.c.h.bf8 %v74
    %v97 = vunpack.c.l.bf8 %v75
    %v98 = vunpack.c.l.bf8 %v76
    %v99 = vunpack.c.h.bf8 %v75
    %v100 = vunpack.c.h.bf8 %v76
    %v101 = vunpack.c.l.bf8 %v77
    %v102 = vunpack.c.l.bf8 %v78
    %v103 = vunpack.c.h.bf8 %v77
    %v104 = vunpack.c.h.bf8 %v78
    %v105 = vunpack.c.l.bf8 %v79
    %v106 = vunpack.c.l.bf8 %v80
    %v107 = vunpack.c.h.bf8 %v79
    %v108 = vunpack.c.h.bf8 %v80
    %v109 = vunpack.c.l.bf8 %v81
    %v110 = vunpack.c.l.bf8 %v82
    %v111 = vunpack.c.h.bf8 %v81
    %v112 = vunpack.c.h.bf8 %v82
    %v113 = vunpack.c.l.bf8 %v83
    %v114 = vunpack.c.l.bf8 %v84
    %v115 = vunpack.c.h.bf8 %v83
    %v116 = vunpack.c.h.bf8 %v84
    %v117 = vld [vmem:[#allocation2] sm:$0xff]
    %v118 = vld [vmem:[#allocation2 + $0x8] sm:$0xff]
    %v119 = vld [vmem:[#allocation2 + $0x10] sm:$0xff]
    %v120 = vld [vmem:[#allocation2 + $0x18] sm:$0xff]
    %121 = vmatprep.subr.bf16.mxu0 %v86
    %122 = vmatpush1.bf16.xpose.msra.mxu0 %v85
    %123 = vmatprep.subr.bf16.mxu0 %v88
    %124 = vmatpush1.bf16.xpose.msra.mxu0 %v87
    %125 = vmatprep.subr.bf16.mxu0 %v90
    %126 = vmatpush1.bf16.xpose.msra.mxu0 %v89
    %127 = vmatprep.subr.bf16.mxu0 %v92
    %128 = vmatpush1.bf16.xpose.msra.mxu0 %v91
    %129 = vmatprep.subr.bf16.mxu0 %v94
    %130 = vmatpush1.bf16.xpose.msra.mxu0 %v93
    %131 = vmatprep.subr.bf16.mxu0 %v96
    %132 = vmatpush1.bf16.xpose.msra.mxu0 %v95
    %133 = vmatprep.subr.bf16.mxu0 %v98
    %134 = vmatpush1.bf16.xpose.msra.mxu0 %v97
    %135 = vmatprep.subr.bf16.mxu0 %v100
    %136 = vmatpush1.bf16.xpose.msra.mxu0 %v99
    %137 = vmatprep.subr.bf16.mxu0 %v102
    %138 = vmatpush1.bf16.xpose.msra.mxu0 %v101
    %139 = vmatprep.subr.bf16.mxu0 %v104
    %140 = vmatpush1.bf16.xpose.msra.mxu0 %v103
    %141 = vmatprep.subr.bf16.mxu0 %v106
    %142 = vmatpush1.bf16.xpose.msra.mxu0 %v105
    %143 = vmatprep.subr.bf16.mxu0 %v108
    %144 = vmatpush1.bf16.xpose.msra.mxu0 %v107
    %145 = vmatprep.subr.bf16.mxu0 %v110
    %146 = vmatpush1.bf16.xpose.msra.mxu0 %v109
    %147 = vmatprep.subr.bf16.mxu0 %v112
    %148 = vmatpush1.bf16.xpose.msra.mxu0 %v111
    %149 = vmatprep.subr.bf16.mxu0 %v114
    %150 = vmatpush1.bf16.xpose.msra.mxu0 %v113
    %151 = vmatprep.subr.bf16.mxu0 %v116
    %152 = vmatpush1.bf16.xpose.msra.mxu0 %v115
    %153 = vmatprep.mubr.bf16.mxu0 %v68
    %154 = vmatmul.mubr.bf16.gmra.mrb[0].mxu0 %v67
    %v155 = vpop.f32.mrb[0].mxu0
    %v156 = vadd.f32 0.0, %v155
    %v157 = vpop.f32.mrb[0].mxu0
    %v158 = vadd.f32 0.0, %v157
    %v159 = vpop.f32.mrb[0].mxu0
    %v160 = vadd.f32 0.0, %v159
    %v161 = vpop.f32.mrb[0].mxu0
    %v162 = vadd.f32 0.0, %v161
    %163 = vdwg.mxu0
    %v164 = vadd.f32 %v117, %v156
    %v165 = vadd.f32 %v118, %v158
    %v166 = vadd.f32 %v119, %v160
    %v167 = vadd.f32 %v120, %v162
    %168 = vst [vmem:[#allocation2] sm:$0xff] %v164
    %169 = vst [vmem:[#allocation2 + $0x8] sm:$0xff] %v165
    %170 = vst [vmem:[#allocation2 + $0x10] sm:$0xff] %v166
    %171 = vst [vmem:[#allocation2 + $0x18] sm:$0xff] %v167
    // Predicated region
    $region26: #{tpu_custom_call.1} parent=1 // pred_check
      %p172 = pneg %p43
    $region27: #{tpu_custom_call.1} parent=1 // pred_check_branch
      %174 = sbr.rel (%p172) target = $region29
    $region28: #{tpu_custom_call.1} parent=1 // pred_region
      %v175 = vld [vmem:[#allocation2] sm:$0xff]
      %v176 = vld [vmem:[#allocation2 + $0x8] sm:$0xff]
      %v177 = vld [vmem:[#allocation2 + $0x10] sm:$0xff]
      %v178 = vld [vmem:[#allocation2 + $0x18] sm:$0xff]
      %v179 = vld [vmem:[%s2] sm:$0x3]
      %v181 = vlaneseq
      %v182 = vshrl.u32 %v181, 7
      %v183 = vsub.s32 0, %v182
      %v184 = vrot.slane %v179, %v183
      %v185 = vlaneseq
      %v186 = vshrl.u32 %v185, 7
      %v187 = vsub.s32 1, %v186
      %v188 = vrot.slane %v179, %v187
      %v191 = vadd.f32 %v175, %v184
      %v192 = vadd.f32 %v176, %v188
      %v193 = vadd.f32 %v177, %v184
      %v194 = vadd.f32 %v178, %v188
      %195 = vst [vmem:[#allocation8] sm:$0xff] %v191
      %196 = vst [vmem:[#allocation8 + $0x8] sm:$0xff] %v192
      %197 = vst [vmem:[#allocation8 + $0x10] sm:$0xff] %v193
      %198 = vst [vmem:[#allocation8 + $0x18] sm:$0xff] %v194
    $region29: #{tpu_custom_call.1} parent=1 // pred_fallthru
      _
    // Predicated region
    $region30: #{tpu_custom_call.1} parent=1 // pred_check
      _
    $region31: #{tpu_custom_call.1} parent=1 // pred_check_branch
      %200 = sbr.rel (0) target = $region33
    $region32: #{tpu_custom_call.1} parent=1 // pred_region
      %s202 = ssub.s32 512, 512
      %203 = vsyncadd [#allocation5], %s202
      %s204 = sshll.u32 [#allocation8], 4
      %s205 = int_to_ptr.vmem [resolvable:$true] %s204
      %210 = dma.vmem_to_hbm [thread:$0]  %s205, 512, %s3, [#allocation5], 256, 256, 16
    $region33: #{tpu_custom_call.1} parent=1 // pred_fallthru
      _
    // Predicated region
    $region34: #{tpu_custom_call.1} parent=1 // pred_check
      _
    $region35: #{tpu_custom_call.1} parent=1 // pred_check_branch
      %212 = sbr.rel (0) target = $region37
    $region36: #{tpu_custom_call.1} parent=1 // pred_region
      %213 = dma.done [#allocation5], 512
    $region37: #{tpu_custom_call.1} parent=1 // pred_fallthru
      _
    %214 = vsyncpa [#allocation4], 1
    %215 = vsyncpa [#allocation7], 1
    %216 = vsyncpa [#allocation5], 1

</llo_original>
